<compile_context>
chip_gen: v7x
topology: tpu7x:2x2x1
jax: 0.10.0
libtpu: 0.0.40
codegen_flags: <defaults>
</compile_context>

<pallas_src>
import functools

import jax
import jax.numpy as jnp
from jax import lax
from jax.experimental import pallas as pl
from jax.experimental.pallas import tpu as pltpu


# --------------------------------------------------------------------------
# Kernel body (flags select masked / attn-writing variants)
# --------------------------------------------------------------------------
def _sdpa_kernel(*refs, temperature, has_mask, write_attn):
    q_ref, k_ref, v_ref = refs[0], refs[1], refs[2]
    pos = 3
    mask_ref = None
    if has_mask:
        mask_ref = refs[pos]
        pos += 1
    out_ref = refs[pos]
    pos += 1
    attn_ref = refs[pos] if write_attn else None

    q = q_ref[0, 0]          # (TQ, Dk)
    k = k_ref[0, 0]          # (Lk, Dk)
    v = v_ref[0, 0]          # (Lk, Dv)

    # Fold 1/temperature into the small (TQ, Dk) q tile; dtype preserved.
    q = q * (1.0 / temperature)

    # scores = q @ k^T without materializing a transpose: contract last dims.
    scores = lax.dot_general(
        q, k,
        dimension_numbers=(((1,), (1,)), ((), ())),
        preferred_element_type=jnp.float32,
    )                                                     # (TQ, Lk) f32

    # Numerically stable softmax; with a calibration mask the intermediate
    # softmax normalization cancels algebraically:
    #   softmax(s)*cal / sum(softmax(s)*cal) == exp(s-m)*cal / sum(exp(s-m)*cal)
    m = jnp.max(scores, axis=-1, keepdims=True)
    e = jnp.exp(scores - m)
    if has_mask:
        e = e * mask_ref[0, 0].astype(jnp.float32)
    denom = jnp.sum(e, axis=-1, keepdims=True)            # (TQ, 1)
    # Exact reciprocal on the tiny (TQ, 1) denom: returned rows sum to 1,
    # and the cost difference vs an approximate reciprocal is negligible.
    # NOTE: a fully-masked row (denom == 0) yields inf/NaN, matching the
    # PyTorch reference's divide-by-zero behavior.
    attn = e * (1.0 / denom)                              # (TQ, Lk) f32

    # dropout(p=0.1): identity in eval/inference mode.

    # Single low-precision cast, reused by the MXU operand and (if dtypes
    # match) the attn store.
    attn_lowp = attn.astype(v.dtype)
    out = jnp.dot(attn_lowp, v, preferred_element_type=jnp.float32)

    out_ref[0, 0] = out.astype(out_ref.dtype)
    if write_attn:
        if attn_ref.dtype == v.dtype:
            attn_ref[0, 0] = attn_lowp
        else:
            attn_ref[0, 0] = attn.astype(attn_ref.dtype)


# --------------------------------------------------------------------------
# Generation-aware VMEM budgeting / tile selection
# --------------------------------------------------------------------------
def _vmem_capacity_bytes():
    try:
        return int(pltpu.get_tpu_info().vmem_capacity_bytes)
    except Exception:
        return 64 * 1024 * 1024   # conservative fallback (v7x per-core VMEM)


def _vmem_bytes(tq, Lk, Dk, Dv, in_itemsize, attn_itemsize, use_mask,
                write_attn):
    f32 = 4
    dbuf = 2  # pallas double-buffers pipelined blocks
    resident = dbuf * in_itemsize * (Lk * Dk + Lk * Dv)            # k, v
    per_tile = dbuf * in_itemsize * (tq * Dk + tq * Dv)            # q, out
    if write_attn:
        per_tile += dbuf * attn_itemsize * (tq * Lk)               # attn out
    if use_mask:
        per_tile += dbuf * in_itemsize * (tq * Lk)                 # mask in
    # f32 temporaries: scores, exp/probs, low-precision probs, out acc,
    # plus the f32 mask copy when masked.
    temps = f32 * (3 * tq * Lk + tq * Dv)
    if use_mask:
        temps += f32 * (tq * Lk)
    return resident + per_tile + temps


def _choose_tq(Lq, Lk, Dk, Dv, in_itemsize, attn_itemsize, use_mask,
               write_attn, budget):
    candidates = [Lq] + [t for t in (2048, 1024, 512, 256, 128, 64, 32, 16, 8)
                         if t < Lq and Lq % t == 0]
    for tq in candidates:
        if _vmem_bytes(tq, Lk, Dk, Dv, in_itemsize, attn_itemsize, use_mask,
                       write_attn) <= budget:
            return tq
    raise ValueError(
        f"ScaledDotProductAttention Pallas kernel: Lk={Lk} (Dk={Dk}, Dv={Dv}) "
        f"does not fit the per-core VMEM budget ({budget >> 20} MiB) even at "
        "the smallest Lq tile; an Lk-chunked (flash-style) path is required "
        "for this shape.")


# --------------------------------------------------------------------------
# Public wrapper
# --------------------------------------------------------------------------
def scaled_dot_product_attention(q, k, v, temperature, calibration_mask=None,
                                 *, tq=None, attn_dtype=None,
                                 return_attn=True):
    """Pallas TPU implementation of the PyTorch ScaledDotProductAttention.

    Returns (output, attn) with output: (B, H, Lq, Dv), attn: (B, H, Lq, Lk).
    With return_attn=False only `output` is returned (skips the dominant
    (B, H, Lq, Lk) HBM write).  attn_dtype lets callers store the
    probabilities in e.g. bf16 to halve that write.
    """
    B, H, Lq, Dk = q.shape
    Lk = k.shape[2]
    Dv = v.shape[3]
    has_mask = calibration_mask is not None
    attn_dtype = jnp.dtype(q.dtype if attn_dtype is None else attn_dtype)
    in_itemsize = jnp.dtype(q.dtype).itemsize
    attn_itemsize = attn_dtype.itemsize

    cap = _vmem_capacity_bytes()
    budget = int(0.6 * cap)          # ~76 MiB on v5e/v6e, ~38 MiB on v7x

    # Validate / pick the Lq tile (must divide Lq; multiple of 8 if < Lq);
    # prefer the largest tile that fits the budget (DMA efficiency + MXU
    # row occupancy both improve with TQ).
    if tq is not None and (tq > Lq or Lq % tq != 0 or (tq < Lq and tq % 8 != 0)):
        tq = None
    if tq is None:
        tq = _choose_tq(Lq, Lk, Dk, Dv, in_itemsize, attn_itemsize, has_mask,
                        return_attn, budget)
    n_q = Lq // tq

    need = _vmem_bytes(tq, Lk, Dk, Dv, in_itemsize, attn_itemsize, has_mask,
                       return_attn)
    # Scoped-VMEM limit sized from the actual footprint + headroom, never
    # more than 75% of the physical capacity (safe on v7x's 64 MiB).
    vmem_limit = int(min(max(32 << 20, need + (6 << 20)), 0.75 * cap))

    q_spec = pl.BlockSpec((1, 1, tq, Dk), lambda b, h, i: (b, h, i, 0))
    k_spec = pl.BlockSpec((1, 1, Lk, Dk), lambda b, h, i: (b, h, 0, 0))
    v_spec = pl.BlockSpec((1, 1, Lk, Dv), lambda b, h, i: (b, h, 0, 0))
    in_specs = [q_spec, k_spec, v_spec]
    args = [q, k, v]
    if has_mask:
        in_specs.append(
            pl.BlockSpec((1, 1, tq, Lk), lambda b, h, i: (b, h, i, 0)))
        args.append(calibration_mask)

    out_specs = [pl.BlockSpec((1, 1, tq, Dv), lambda b, h, i: (b, h, i, 0))]
    out_shape = [jax.ShapeDtypeStruct((B, H, Lq, Dv), q.dtype)]
    if return_attn:
        out_specs.append(
            pl.BlockSpec((1, 1, tq, Lk), lambda b, h, i: (b, h, i, 0)))
        out_shape.append(jax.ShapeDtypeStruct((B, H, Lq, Lk), attn_dtype))

    kernel = functools.partial(_sdpa_kernel,
                               temperature=float(temperature),
                               has_mask=has_mask,
                               write_attn=return_attn)

    results = pl.pallas_call(
        kernel,
        out_shape=tuple(out_shape),
        grid_spec=pltpu.PrefetchScalarGridSpec(
            num_scalar_prefetch=0,
            grid=(B, H, n_q),
            in_specs=in_specs,
            out_specs=out_specs,
        ),
        compiler_params=pltpu.CompilerParams(
            # No accumulator across the Lq axis -> all axes are parallel
            # (lets v7x shard over Lq when B*H is small or odd).
            dimension_semantics=("parallel", "parallel", "parallel"),
            vmem_limit_bytes=vmem_limit),
    )(*args)

    if return_attn:
        out, attn = results
        return out, attn
    return results[0]


# --------------------------------------------------------------------------
# Pure-JAX reference (computed in f32)
# --------------------------------------------------------------------------
def _reference(q, k, v, temperature, calibration_mask=None):
    q, k, v = (x.astype(jnp.float32) for x in (q, k, v))
    attn = jnp.einsum("bhqd,bhkd->bhqk", q / temperature, k)
    attn = jax.nn.softmax(attn, axis=-1)
    if calibration_mask is not None:
        attn = attn * calibration_mask.astype(jnp.float32)
        attn = attn / jnp.sum(attn, axis=-1, keepdims=True)
    out = jnp.einsum("bhqk,bhkd->bhqd", attn, v)
    return out, attn


if __name__ == "__main__":
    key = jax.random.PRNGKey(0)
    kq, kk, kv, km, kq2, kk2, kv2, km2 = jax.random.split(key, 8)

    # ---- Test 1: small f32 shapes (matches the module's toy usage) ----
    B, H, Lq, Lk, Dk, Dv = 2, 4, 8, 8, 16, 16
    temperature = float(Dk) ** 0.5
    q = jax.random.normal(kq, (B, H, Lq, Dk), dtype=jnp.float32)
    k = jax.random.normal(kk, (B, H, Lk, Dk), dtype=jnp.float32)
    v = jax.random.normal(kv, (B, H, Lk, Dv), dtype=jnp.float32)
    cal = jax.random.uniform(km, (B, H, Lq, Lk), dtype=jnp.float32,
                             minval=0.1, maxval=1.0)

    out, attn = scaled_dot_product_attention(q, k, v, temperature)
    jax.block_until_ready((out, attn))
    r_out, r_attn = _reference(q, k, v, temperature)
    assert jnp.allclose(out, r_out, atol=5e-3, rtol=5e-3)
    assert jnp.allclose(attn, r_attn, atol=5e-3, rtol=5e-3)

    out_m, attn_m = scaled_dot_product_attention(q, k, v, temperature, cal)
    jax.block_until_ready((out_m, attn_m))
    r_out_m, r_attn_m = _reference(q, k, v, temperature, cal)
    assert jnp.allclose(out_m, r_out_m, atol=5e-3, rtol=5e-3)
    assert jnp.allclose(attn_m, r_attn_m, atol=5e-3, rtol=5e-3)

    # ---- Test 1b: attn-free variant + low-precision attn output ----
    out_only = scaled_dot_product_attention(q, k, v, temperature, cal,
                                            return_attn=False)
    jax.block_until_ready(out_only)
    assert jnp.allclose(out_only, r_out_m, atol=5e-3, rtol=5e-3)

    out_b, attn_b = scaled_dot_product_attention(q, k, v, temperature, cal,
                                                 attn_dtype=jnp.bfloat16)
    jax.block_until_ready((out_b, attn_b))
    assert jnp.allclose(out_b, r_out_m, atol=5e-3, rtol=5e-3)
    assert jnp.allclose(attn_b.astype(jnp.float32), r_attn_m,
                        atol=2e-2, rtol=2e-2)

    # ---- Test 2: bf16 inputs, Lq tiled onto the grid (lane-dense attn) ----
    B2, H2, Lq2, Lk2, Dk2, Dv2 = 2, 2, 256, 128, 64, 64
    temp2 = float(Dk2) ** 0.5
    q2 = jax.random.normal(kq2, (B2, H2, Lq2, Dk2), dtype=jnp.bfloat16)
    k2 = jax.random.normal(kk2, (B2, H2, Lk2, Dk2), dtype=jnp.bfloat16)
    v2 = jax.random.normal(kv2, (B2, H2, Lk2, Dv2), dtype=jnp.bfloat16)
    cal2 = jax.random.uniform(km2, (B2, H2, Lq2, Lk2), dtype=jnp.bfloat16,
                              minval=0.1, maxval=1.0)

    out2, attn2 = scaled_dot_product_attention(q2, k2, v2, temp2, cal2, tq=128)
    jax.block_until_ready((out2, attn2))
    r_out2, r_attn2 = _reference(q2, k2, v2, temp2, cal2)
    assert jnp.allclose(out2.astype(jnp.float32), r_out2, atol=3e-2, rtol=3e-2)
    assert jnp.allclose(attn2.astype(jnp.float32), r_attn2, atol=3e-2, rtol=3e-2)

    print("KERNEL_OK")
</pallas_src>

<mosaic_0001>
module attributes {stable_mosaic.version = 11 : i64} {
  func.func @_sdpa_kernel(%arg0: i32, %arg1: i32, %arg2: i32, %arg3: memref<1x1x8x16xf32, #tpu.memory_space<vmem>>, %arg4: memref<1x1x8x16xf32, #tpu.memory_space<vmem>>, %arg5: memref<1x1x8x16xf32, #tpu.memory_space<vmem>>, %arg6: memref<1x1x8x16xf32, #tpu.memory_space<vmem>>, %arg7: memref<1x1x8x8xf32, #tpu.memory_space<vmem>>) attributes {dimension_semantics = [#tpu.dimension_semantics<parallel>, #tpu.dimension_semantics<parallel>, #tpu.dimension_semantics<parallel>], iteration_bounds = array<i64: 2, 4, 1>, scalar_prefetch = 0 : i64, scratch_operands = 0 : i64, tpu.core_type = #tpu.core_type<tc>, window_params = [{transform_indices = @transform_0, window_bounds = array<i64: 1, 1, 8, 16>}, {transform_indices = @transform_1, window_bounds = array<i64: 1, 1, 8, 16>}, {transform_indices = @transform_2, window_bounds = array<i64: 1, 1, 8, 16>}, {transform_indices = @transform_3, window_bounds = array<i64: 1, 1, 8, 16>}, {transform_indices = @transform_4, window_bounds = array<i64: 1, 1, 8, 8>}]} {
    %c0 = arith.constant 0 : index
    %c0_0 = arith.constant 0 : index
    %c0_1 = arith.constant 0 : index
    %c0_2 = arith.constant 0 : index
    %0 = vector.load %arg3[%c0, %c0_0, %c0_1, %c0_2] : memref<1x1x8x16xf32, #tpu.memory_space<vmem>>, vector<1x1x8x16xf32>
    %1 = vector.shape_cast %0 : vector<1x1x8x16xf32> to vector<8x16xf32>
    %c0_3 = arith.constant 0 : index
    %c0_4 = arith.constant 0 : index
    %c0_5 = arith.constant 0 : index
    %c0_6 = arith.constant 0 : index
    %2 = vector.load %arg4[%c0_3, %c0_4, %c0_5, %c0_6] : memref<1x1x8x16xf32, #tpu.memory_space<vmem>>, vector<1x1x8x16xf32>
    %3 = vector.shape_cast %2 : vector<1x1x8x16xf32> to vector<8x16xf32>
    %c0_7 = arith.constant 0 : index
    %c0_8 = arith.constant 0 : index
    %c0_9 = arith.constant 0 : index
    %c0_10 = arith.constant 0 : index
    %4 = vector.load %arg5[%c0_7, %c0_8, %c0_9, %c0_10] : memref<1x1x8x16xf32, #tpu.memory_space<vmem>>, vector<1x1x8x16xf32>
    %5 = vector.shape_cast %4 : vector<1x1x8x16xf32> to vector<8x16xf32>
    %cst = arith.constant 2.500000e-01 : f32
    %6 = vector.broadcast %cst : f32 to vector<8x16xf32>
    %7 = arith.mulf %1, %6 : vector<8x16xf32>
    %cst_11 = arith.constant dense<0.000000e+00> : vector<8x8xf32>
    %8 = tpu.matmul %7, %3, %cst_11 {dimension_numbers = #tpu.dot_dimension_numbers<[1], [1], [0], [0], [0, 0, 1, 0], [], []>} : vector<8x16xf32>, vector<8x16xf32>, vector<8x8xf32> -> vector<8x8xf32>
    %cst_12 = arith.constant dense<0xFF800000> : vector<8xf32>
    %9 = vector.multi_reduction <maximumf>, %8, %cst_12 [1] : vector<8x8xf32> to vector<8xf32>
    %10 = vector.shape_cast %9 : vector<8xf32> to vector<8x1xf32>
    %11 = vector.broadcast %10 : vector<8x1xf32> to vector<8x8xf32>
    %12 = arith.subf %8, %11 : vector<8x8xf32>
    %13 = math.exp %12 : vector<8x8xf32>
    %cst_13 = arith.constant dense<0.000000e+00> : vector<8xf32>
    %14 = vector.multi_reduction <add>, %13, %cst_13 [1] : vector<8x8xf32> to vector<8xf32>
    %15 = vector.shape_cast %14 : vector<8xf32> to vector<8x1xf32>
    %cst_14 = arith.constant 1.000000e+00 : f32
    %16 = vector.broadcast %cst_14 : f32 to vector<8x1xf32>
    %17 = arith.divf %16, %15 : vector<8x1xf32>
    %18 = vector.broadcast %17 : vector<8x1xf32> to vector<8x8xf32>
    %19 = arith.mulf %13, %18 : vector<8x8xf32>
    %cst_15 = arith.constant dense<0.000000e+00> : vector<8x16xf32>
    %20 = tpu.matmul %19, %5, %cst_15 {dimension_numbers = #tpu.dot_dimension_numbers<[1], [0], [0], [1], [0, 0, 1, 1], [], []>} : vector<8x8xf32>, vector<8x16xf32>, vector<8x16xf32> -> vector<8x16xf32>
    %c0_16 = arith.constant 0 : index
    %c0_17 = arith.constant 0 : index
    %c0_18 = arith.constant 0 : index
    %c0_19 = arith.constant 0 : index
    %21 = vector.load %arg6[%c0_16, %c0_17, %c0_18, %c0_19] : memref<1x1x8x16xf32, #tpu.memory_space<vmem>>, vector<1x1x8x16xf32>
    %22 = vector.shape_cast %21 : vector<1x1x8x16xf32> to vector<8x16xf32>
    %23 = vector.shape_cast %20 : vector<8x16xf32> to vector<1x1x8x16xf32>
    tpu.vector_store %arg6[%c0_16, %c0_17, %c0_18, %c0_19], %23 {strides = array<i32>} : memref<1x1x8x16xf32, #tpu.memory_space<vmem>>, vector<1x1x8x16xf32>,
    %c0_20 = arith.constant 0 : index
    %c0_21 = arith.constant 0 : index
    %c0_22 = arith.constant 0 : index
    %c0_23 = arith.constant 0 : index
    %24 = vector.load %arg7[%c0_20, %c0_21, %c0_22, %c0_23] : memref<1x1x8x8xf32, #tpu.memory_space<vmem>>, vector<1x1x8x8xf32>
    %25 = vector.shape_cast %24 : vector<1x1x8x8xf32> to vector<8x8xf32>
    %26 = vector.shape_cast %19 : vector<8x8xf32> to vector<1x1x8x8xf32>
    tpu.vector_store %arg7[%c0_20, %c0_21, %c0_22, %c0_23], %26 {strides = array<i32>} : memref<1x1x8x8xf32, #tpu.memory_space<vmem>>, vector<1x1x8x8xf32>,
    return
  }
  func.func @transform_0(%arg0: i32, %arg1: i32, %arg2: i32) -> (i32, i32, i32, i32) {
    %c0_i32 = arith.constant 0 : i32
    %c0_i32_0 = arith.constant 0 : i32
    return %arg0, %arg1, %arg2, %c0_i32 : i32, i32, i32, i32
  }
  func.func @transform_1(%arg0: i32, %arg1: i32, %arg2: i32) -> (i32, i32, i32, i32) {
    %c0_i32 = arith.constant 0 : i32
    %c0_i32_0 = arith.constant 0 : i32
    %c0_i32_1 = arith.constant 0 : i32
    return %arg0, %arg1, %c0_i32, %c0_i32_0 : i32, i32, i32, i32
  }
  func.func @transform_2(%arg0: i32, %arg1: i32, %arg2: i32) -> (i32, i32, i32, i32) {
    %c0_i32 = arith.constant 0 : i32
    %c0_i32_0 = arith.constant 0 : i32
    %c0_i32_1 = arith.constant 0 : i32
    return %arg0, %arg1, %c0_i32, %c0_i32_0 : i32, i32, i32, i32
  }
  func.func @transform_3(%arg0: i32, %arg1: i32, %arg2: i32) -> (i32, i32, i32, i32) {
    %c0_i32 = arith.constant 0 : i32
    %c0_i32_0 = arith.constant 0 : i32
    return %arg0, %arg1, %arg2, %c0_i32 : i32, i32, i32, i32
  }
  func.func @transform_4(%arg0: i32, %arg1: i32, %arg2: i32) -> (i32, i32, i32, i32) {
    %c0_i32 = arith.constant 0 : i32
    %c0_i32_0 = arith.constant 0 : i32
    return %arg0, %arg1, %arg2, %c0_i32 : i32, i32, i32, i32
  }
}

</mosaic_0001>

<llo_original>
// kernel: tpu_custom_call.1
$region0: #{tpu_custom_call.1}
  #allocation0 [shape = 'u32[]', space=smem, size = 0x4, offset = 0x4, fixed_abs, tag = 'smem constant byte address 0x4 - core index']
  #allocation1 [shape = 'u32[144,128]{1,0:T(1,128)}', space=vmem, size = 0x12000, scoped, tag = 'internal scratch']
  %s0 = inlined_call_operand.hbm [shape: f32[2,4,8,16], index: 0, kind: input, shape index: {}]
  %s1 = inlined_call_operand.hbm [shape: f32[2,4,8,16], index: 1, kind: input, shape index: {}]
  %s2 = inlined_call_operand.hbm [shape: f32[2,4,8,16], index: 2, kind: input, shape index: {}]
  %s3 = inlined_call_operand.hbm [shape: f32[2,4,8,16], index: 3, kind: output, shape index: {0}]
  %s4 = inlined_call_operand.hbm [shape: f32[2,4,8,8], index: 4, kind: output, shape index: {1}]
  %5 = xla_tuple %s3, %s4
  %s6 = sld [smem:[#allocation0]]
  $region65: #{tpu_custom_call.1} parent=0
    _
  %s8 = ssub.s32 1, %s6
  %s9 = scalar_select 0, %s8, %s6
  $region1: #{tpu_custom_call.1} parent=0
    #allocation2 [shape = 'u8[8192]{0}', space=vmem, size = 0x2000, scoped, tag = 'input window, operand 0']
    #allocation3 [shape = 's32[2]{0}', space=sflag, size = 0x8, scoped, tag = 'scoped memory for tpu_custom_call.1']
    #allocation4 [shape = 's32[2]{0}', space=sflag, size = 0x8, scoped, tag = 'scoped memory for tpu_custom_call.1']
    #allocation5 [shape = 'u8[8192]{0}', space=vmem, size = 0x2000, scoped, tag = 'input window, operand 1']
    #allocation6 [shape = 's32[2]{0}', space=sflag, size = 0x8, scoped, tag = 'scoped memory for tpu_custom_call.1']
    #allocation7 [shape = 'u8[8192]{0}', space=vmem, size = 0x2000, scoped, tag = 'input window, operand 2']
    #allocation8 [shape = 'u8[8192]{0}', space=vmem, size = 0x2000, scoped, tag = 'output window, operand 0']
    #allocation9 [shape = 'u8[8192]{0}', space=vmem, size = 0x2000, scoped, tag = 'output window, operand 1']
    #allocation10 [shape = 's32[2]{0}', space=sflag, size = 0x8, scoped, tag = 'scoped memory for tpu_custom_call.1']
    %10 = vsyncpa [#allocation3], 0
    %s11 = scalar_lea.sflag [#allocation3], 1
    %12 = vsyncpa %s11, 0
    %13 = vsyncpa [#allocation6], 0
    %s14 = scalar_lea.sflag [#allocation6], 1
    %15 = vsyncpa %s14, 0
    %16 = vsyncpa [#allocation4], 0
    %s17 = scalar_lea.sflag [#allocation4], 1
    %18 = vsyncpa %s17, 0
    %19 = vsyncpa [#allocation10], 0
    %s20 = scalar_lea.sflag [#allocation10], 1
    %21 = vsyncpa %s20, 0
    loop: start=0, step=1, limit=10
    $region2: #{tpu_custom_call.1} parent=1 // loop_pre_header
      _
    $region3: #{tpu_custom_call.1} parent=1 // loop_header
      %s23 = sphi 0, %s27
      %p24 = scmp.ge.s32.totalorder %s23, 10
      %s30 = sphi 0, %s49
      %s31 = sphi 0, %s45
      %s32 = sphi 0, %s41
      %s33 = sphi 0, %s30
      %s34 = sphi 0, %s31
      %s35 = sphi 0, %s32
      %s36 = sphi 0, %s33
      %s37 = sphi 0, %s34
      %s38 = sphi 0, %s35
      %s56 = sphi 0, %s58
      %s59 = sphi 0, %s56
      %s60 = sphi 0, %s59
      %s76 = sphi 0, %s60
      %s84 = sphi 0, %s86
      %s87 = sphi 0, %s84
      %s88 = sphi 0, %s87
      %s104 = sphi 0, %s88
      %s112 = sphi 0, %s114
      %s115 = sphi 0, %s112
      %s116 = sphi 0, %s115
      %s132 = sphi 0, %s116
      %s142 = sphi 0, %s144
      %s145 = sphi 0, %s142
      %s146 = sphi 0, %s145
      %s162 = sphi 0, %s146
      %s172 = sphi 0, %s174
      %s175 = sphi 0, %s172
      %s176 = sphi 0, %s175
      %s192 = sphi 0, %s176
    $region4: #{tpu_custom_call.1} parent=1 // loop_header_branch
      %26 = sbr.rel (%p24) target = $region8
    $region5: #{tpu_custom_call.1} parent=1 // loop_body
      %s28 = ssub.s32 %s23, 1
      %s29 = ssub.s32 %s23, 2
      %s39 = sadd.s32 1, %s32
      %p40 = scmp.ge.s32.totalorder %s39, 1
      %s41 = scalar_select %p40, 0, %s39
      %s42 = sadd.s32 1, %s31
      %s43 = scalar_select %p40, %s42, %s31
      %p44 = scmp.ge.s32.totalorder %s43, 4
      %s45 = scalar_select %p44, 0, %s43
      %s46 = sadd.s32 1, %s30
      %s47 = scalar_select %p44, %s46, %s30
      %p48 = scmp.ge.s32.totalorder %s47, 2
      %s49 = scalar_select %p48, 0, %s47
      %s50 = ssub.s32 %s30, %s49
      %s51 = ssub.s32 %s31, %s45
      %s52 = sor.u32 %s50, %s51
      %s53 = ssub.s32 %s32, %s41
      %s54 = sor.u32 %s52, %s53
      %p55 = scmp.eq.s32.totalorder %s54, 0
      %s57 = sadd.s32 %s56, 1
      %s58 = scalar_select %p55, %s56, %s57
      %p61 = pneg %p55
      %p62 = scmp.eq.s32.totalorder %s23, 7
      %p63 = por %p61, %p62
      %p64 = scmp.ne.s32.totalorder %s56, %s59
      %p65 = scmp.eq.s32.totalorder %s23, 0
      %p66 = por %p64, %p65
      %p67 = scmp.ne.s32.totalorder %s56, %s59
      %p68 = scmp.eq.s32.totalorder %s28, 7
      %p69 = por %p67, %p68
      %p70 = scmp.ne.s32.totalorder %s59, %s60
      %p71 = scmp.eq.s32.totalorder %s28, 0
      %p72 = por %p70, %p71
      %p73 = scmp.ne.s32.totalorder %s59, %s60
      %p74 = scmp.eq.s32.totalorder %s29, 7
      %p75 = por %p73, %p74
      %p77 = scmp.ne.s32.totalorder %s60, %s76
      %p78 = scmp.eq.s32.totalorder %s29, 0
      %p79 = por %p77, %p78
      %s80 = ssub.s32 %s30, %s49
      %s81 = ssub.s32 %s31, %s45
      %s82 = sor.u32 %s80, %s81
      %p83 = scmp.eq.s32.totalorder %s82, 0
      %s85 = sadd.s32 %s84, 1
      %s86 = scalar_select %p83, %s84, %s85
      %p89 = pneg %p83
      %p90 = scmp.eq.s32.totalorder %s23, 7
      %p91 = por %p89, %p90
      %p92 = scmp.ne.s32.totalorder %s84, %s87
      %p93 = scmp.eq.s32.totalorder %s23, 0
      %p94 = por %p92, %p93
      %p95 = scmp.ne.s32.totalorder %s84, %s87
      %p96 = scmp.eq.s32.totalorder %s28, 7
      %p97 = por %p95, %p96
      %p98 = scmp.ne.s32.totalorder %s87, %s88
      %p99 = scmp.eq.s32.totalorder %s28, 0
      %p100 = por %p98, %p99
      %p101 = scmp.ne.s32.totalorder %s87, %s88
      %p102 = scmp.eq.s32.totalorder %s29, 7
      %p103 = por %p101, %p102
      %p105 = scmp.ne.s32.totalorder %s88, %s104
      %p106 = scmp.eq.s32.totalorder %s29, 0
      %p107 = por %p105, %p106
      %s108 = ssub.s32 %s30, %s49
      %s109 = ssub.s32 %s31, %s45
      %s110 = sor.u32 %s108, %s109
      %p111 = scmp.eq.s32.totalorder %s110, 0
      %s113 = sadd.s32 %s112, 1
      %s114 = scalar_select %p111, %s112, %s113
      %p117 = pneg %p111
      %p118 = scmp.eq.s32.totalorder %s23, 7
      %p119 = por %p117, %p118
      %p120 = scmp.ne.s32.totalorder %s112, %s115
      %p121 = scmp.eq.s32.totalorder %s23, 0
      %p122 = por %p120, %p121
      %p123 = scmp.ne.s32.totalorder %s112, %s115
      %p124 = scmp.eq.s32.totalorder %s28, 7
      %p125 = por %p123, %p124
      %p126 = scmp.ne.s32.totalorder %s115, %s116
      %p127 = scmp.eq.s32.totalorder %s28, 0
      %p128 = por %p126, %p127
      %p129 = scmp.ne.s32.totalorder %s115, %s116
      %p130 = scmp.eq.s32.totalorder %s29, 7
      %p131 = por %p129, %p130
      %p133 = scmp.ne.s32.totalorder %s116, %s132
      %p134 = scmp.eq.s32.totalorder %s29, 0
      %p135 = por %p133, %p134
      %s136 = ssub.s32 %s30, %s49
      %s137 = ssub.s32 %s31, %s45
      %s138 = sor.u32 %s136, %s137
      %s139 = ssub.s32 %s32, %s41
      %s140 = sor.u32 %s138, %s139
      %p141 = scmp.eq.s32.totalorder %s140, 0
      %s143 = sadd.s32 %s142, 1
      %s144 = scalar_select %p141, %s142, %s143
      %p147 = pneg %p141
      %p148 = scmp.eq.s32.totalorder %s23, 7
      %p149 = por %p147, %p148
      %p150 = scmp.ne.s32.totalorder %s142, %s145
      %p151 = scmp.eq.s32.totalorder %s23, 0
      %p152 = por %p150, %p151
      %p153 = scmp.ne.s32.totalorder %s142, %s145
      %p154 = scmp.eq.s32.totalorder %s28, 7
      %p155 = por %p153, %p154
      %p156 = scmp.ne.s32.totalorder %s145, %s146
      %p157 = scmp.eq.s32.totalorder %s28, 0
      %p158 = por %p156, %p157
      %p159 = scmp.ne.s32.totalorder %s145, %s146
      %p160 = scmp.eq.s32.totalorder %s29, 7
      %p161 = por %p159, %p160
      %p163 = scmp.ne.s32.totalorder %s146, %s162
      %p164 = scmp.eq.s32.totalorder %s29, 0
      %p165 = por %p163, %p164
      %s166 = ssub.s32 %s30, %s49
      %s167 = ssub.s32 %s31, %s45
      %s168 = sor.u32 %s166, %s167
      %s169 = ssub.s32 %s32, %s41
      %s170 = sor.u32 %s168, %s169
      %p171 = scmp.eq.s32.totalorder %s170, 0
      %s173 = sadd.s32 %s172, 1
      %s174 = scalar_select %p171, %s172, %s173
      %p177 = pneg %p171
      %p178 = scmp.eq.s32.totalorder %s23, 7
      %p179 = por %p177, %p178
      %p180 = scmp.ne.s32.totalorder %s172, %s175
      %p181 = scmp.eq.s32.totalorder %s23, 0
      %p182 = por %p180, %p181
      %p183 = scmp.ne.s32.totalorder %s172, %s175
      %p184 = scmp.eq.s32.totalorder %s28, 7
      %p185 = por %p183, %p184
      %p186 = scmp.ne.s32.totalorder %s175, %s176
      %p187 = scmp.eq.s32.totalorder %s28, 0
      %p188 = por %p186, %p187
      %p189 = scmp.ne.s32.totalorder %s175, %s176
      %p190 = scmp.eq.s32.totalorder %s29, 7
      %p191 = por %p189, %p190
      %p193 = scmp.ne.s32.totalorder %s176, %s192
      %p194 = scmp.eq.s32.totalorder %s29, 0
      %p195 = por %p193, %p194
      %p196 = scmp.le.s32.totalorder 1, %s23
      %p197 = scmp.lt.s32.totalorder %s23, 9
      %p198 = pnand %p196, %p197
      %p199 = pneg %p198
      // Predicated region
      $region9: #{tpu_custom_call.1} parent=5 // pred_check
        _
      $region10: #{tpu_custom_call.1} parent=5 // pred_check_branch
        %201 = sbr.rel (%p198) target = $region12
      $region11: #{tpu_custom_call.1} parent=5 // pred_region
        %s202 = ssub.s32 %s23, 1
      $region12: #{tpu_custom_call.1} parent=5 // pred_fallthru
        _
      %p203 = scmp.lt.s32.totalorder %s23, 8
      // Predicated region
      $region13: #{tpu_custom_call.1} parent=5 // pred_check
        %p204 = pneg %p203
      $region14: #{tpu_custom_call.1} parent=5 // pred_check_branch
        %206 = sbr.rel (%p204) target = $region16
      $region15: #{tpu_custom_call.1} parent=5 // pred_region
        // Predicated region
        $region17: #{tpu_custom_call.1} parent=15 // pred_check
          %p207 = pneg %p66
        $region18: #{tpu_custom_call.1} parent=15 // pred_check_branch
          %209 = sbr.rel (%p207) target = $region20
        $region19: #{tpu_custom_call.1} parent=15 // pred_region
          %s210 = sand.u32 %s56, 1
          %s211 = scalar_lea.sflag [#allocation3], %s210
          %s212 = sand.u32 %s56, 1
          %s213 = smul.addr %s212, 8
          %s214 = scalar_lea.vmem [#allocation2], %s213
          %s216 = ssub.s32 128, 128
          %217 = vsyncadd %s211, %s216
          %s218 = sadd.s32 %s32, %s31
          %s219 = smul.addr %s30, 4
          %s220 = sadd.s32 %s218, %s219
          %s221 = smul.addr %s220, 128
          %s222 = scalar_lea.hbm %s0, %s221
          %s224 = sshll.u32 %s214, 4
          %s225 = int_to_ptr.vmem [resolvable:$true] %s224
          %227 = dma.hbm_to_vmem [thread:$0]  %s222, 128, %s225, %s211
        $region20: #{tpu_custom_call.1} parent=15 // pred_fallthru
          _
        // Predicated region
        $region21: #{tpu_custom_call.1} parent=15 // pred_check
          %p228 = pneg %p94
        $region22: #{tpu_custom_call.1} parent=15 // pred_check_branch
          %230 = sbr.rel (%p228) target = $region24
        $region23: #{tpu_custom_call.1} parent=15 // pred_region
          %s231 = sand.u32 %s23, 1
          %s232 = scalar_lea.sflag [#allocation6], %s231
          %s233 = sand.u32 %s84, 1
          %s234 = smul.addr %s233, 8
          %s235 = scalar_lea.vmem [#allocation5], %s234
          %s237 = ssub.s32 128, 128
          %238 = vsyncadd %s232, %s237
          %s239 = smul.addr %s30, 4
          %s240 = sadd.s32 %s31, %s239
          %s241 = smul.addr %s240, 128
          %s242 = scalar_lea.hbm %s1, %s241
          %s244 = sshll.u32 %s235, 4
          %s245 = int_to_ptr.vmem [resolvable:$true] %s244
          %247 = dma.hbm_to_vmem [thread:$0]  %s242, 128, %s245, %s232
        $region24: #{tpu_custom_call.1} parent=15 // pred_fallthru
          _
        // Predicated region
        $region25: #{tpu_custom_call.1} parent=15 // pred_check
          %p248 = pneg %p122
        $region26: #{tpu_custom_call.1} parent=15 // pred_check_branch
          %250 = sbr.rel (%p248) target = $region28
        $region27: #{tpu_custom_call.1} parent=15 // pred_region
          %s251 = sand.u32 %s23, 1
          %s252 = scalar_lea.sflag [#allocation6], %s251
          %s253 = sand.u32 %s112, 1
          %s254 = smul.addr %s253, 8
          %s255 = scalar_lea.vmem [#allocation7], %s254
          %s257 = ssub.s32 128, 128
          %258 = vsyncadd %s252, %s257
          %s259 = smul.addr %s30, 4
          %s260 = sadd.s32 %s31, %s259
          %s261 = smul.addr %s260, 128
          %s262 = scalar_lea.hbm %s2, %s261
          %s264 = sshll.u32 %s255, 4
          %s265 = int_to_ptr.vmem [resolvable:$true] %s264
          %267 = dma.hbm_to_vmem [thread:$0]  %s262, 128, %s265, %s252
        $region28: #{tpu_custom_call.1} parent=15 // pred_fallthru
          _
      $region16: #{tpu_custom_call.1} parent=5 // pred_fallthru
        _
      %p268 = scmp.le.s32.totalorder 1, %s23
      %p269 = scmp.lt.s32.totalorder %s23, 9
      %p270 = pnand %p268, %p269
      %p271 = pneg %p270
      // Predicated region
      $region29: #{tpu_custom_call.1} parent=5 // pred_check
        _
      $region30: #{tpu_custom_call.1} parent=5 // pred_check_branch
        %273 = sbr.rel (%p270) target = $region32
      $region31: #{tpu_custom_call.1} parent=5 // pred_region
        %s274 = ssub.s32 %s23, 1
        %s275 = sand.u32 %s59, 1
        %s276 = scalar_lea.sflag [#allocation3], %s275
        %s277 = sand.u32 %s59, 1
        %s278 = smul.addr %s277, 8
        %s279 = scalar_lea.vmem [#allocation2], %s278
        // Predicated region
        $region33: #{tpu_custom_call.1} parent=31 // pred_check
          %p280 = pneg %p72
        $region34: #{tpu_custom_call.1} parent=31 // pred_check_branch
          %282 = sbr.rel (%p280) target = $region36
        $region35: #{tpu_custom_call.1} parent=31 // pred_region
          %283 = dma.done %s276, 128
        $region36: #{tpu_custom_call.1} parent=31 // pred_fallthru
          _
        %s284 = sand.u32 %s28, 1
        %s285 = scalar_lea.sflag [#allocation6], %s284
        %s286 = sand.u32 %s87, 1
        %s287 = smul.addr %s286, 8
        %s288 = scalar_lea.vmem [#allocation5], %s287
        // Predicated region
        $region37: #{tpu_custom_call.1} parent=31 // pred_check
          %p289 = pneg %p100
        $region38: #{tpu_custom_call.1} parent=31 // pred_check_branch
          %291 = sbr.rel (%p289) target = $region40
        $region39: #{tpu_custom_call.1} parent=31 // pred_region
          %292 = dma.done %s285, 128
        $region40: #{tpu_custom_call.1} parent=31 // pred_fallthru
          _
        %s293 = sand.u32 %s28, 1
        %s294 = scalar_lea.sflag [#allocation6], %s293
        %s295 = sand.u32 %s115, 1
        %s296 = smul.addr %s295, 8
        %s297 = scalar_lea.vmem [#allocation7], %s296
        // Predicated region
        $region41: #{tpu_custom_call.1} parent=31 // pred_check
          %p298 = pneg %p128
        $region42: #{tpu_custom_call.1} parent=31 // pred_check_branch
          %300 = sbr.rel (%p298) target = $region44
        $region43: #{tpu_custom_call.1} parent=31 // pred_region
          %301 = dma.done %s294, 128
        $region44: #{tpu_custom_call.1} parent=31 // pred_fallthru
          _
        %s302 = sand.u32 %s59, 1
        %s303 = scalar_lea.sflag [#allocation3], %s302
        %s304 = sand.u32 %s59, 1
        %s305 = smul.addr %s304, 8
        %s306 = scalar_lea.vmem [#allocation2], %s305
        %p307 = pneg %p72
        %p308 = pneg %p69
        %s309 = sand.u32 %s28, 1
        %s310 = scalar_lea.sflag [#allocation6], %s309
        %s311 = sand.u32 %s87, 1
        %s312 = smul.addr %s311, 8
        %s313 = scalar_lea.vmem [#allocation5], %s312
        %p314 = pneg %p100
        %p315 = pneg %p97
        %s316 = sand.u32 %s28, 1
        %s317 = scalar_lea.sflag [#allocation6], %s316
        %s318 = sand.u32 %s115, 1
        %s319 = smul.addr %s318, 8
        %s320 = scalar_lea.vmem [#allocation7], %s319
        %p321 = pneg %p128
        %p322 = pneg %p125
        %p323 = pneg %p158
        %p324 = pneg %p155
        %s325 = sand.u32 %s145, 1
        %s326 = scalar_lea.sflag [#allocation4], %s325
        %s327 = sand.u32 %s145, 1
        %s328 = smul.addr %s327, 8
        %s329 = scalar_lea.vmem [#allocation8], %s328
        %p330 = pneg %p188
        %p331 = pneg %p185
        %s332 = sand.u32 %s175, 1
        %s333 = scalar_lea.sflag [#allocation10], %s332
        %s334 = sand.u32 %s175, 1
        %s335 = smul.addr %s334, 8
        %s336 = scalar_lea.vmem [#allocation9], %s335
        %v337 = vld [vmem:[%s279] sm:$0xff]
        %v338 = vld [vmem:[%s288] sm:$0xff]
        %v339 = vld [vmem:[%s297] sm:$0xff]
        %v340 = vmul.f32 %v337, 0.25
        %vm341 = vcmask 130048
        %v343 = vsel %vm341, %v340, 0
        %v346 = vsel %vm341, %v338, 0
        %348 = vmatprep.subr.mxu0 0.0
        %349 = vmatpush1.xpose.msra.mxu0 %v346
        %350 = vmatprep.subr.mxu0 0.0
        %351 = vmatpush1.xpose.msra.mxu0 0.0
        %352 = vmatprep.subr.mxu0 0.0
        %353 = vmatpush1.xpose.msra.mxu0 0.0
        %354 = vmatprep.subr.mxu0 0.0
        %355 = vmatpush1.xpose.msra.mxu0 0.0
        %356 = vmatprep.subr.mxu0 0.0
        %357 = vmatpush1.xpose.msra.mxu0 0.0
        %358 = vmatprep.subr.mxu0 0.0
        %359 = vmatpush1.xpose.msra.mxu0 0.0
        %360 = vmatprep.subr.mxu0 0.0
        %361 = vmatpush1.xpose.msra.mxu0 0.0
        %362 = vmatprep.subr.mxu0 0.0
        %363 = vmatpush1.xpose.msra.mxu0 0.0
        %364 = vmatprep.subr.mxu0 0.0
        %365 = vmatpush1.xpose.msra.mxu0 0.0
        %366 = vmatprep.subr.mxu0 0.0
        %367 = vmatpush1.xpose.msra.mxu0 0.0
        %368 = vmatprep.subr.mxu0 0.0
        %369 = vmatpush1.xpose.msra.mxu0 0.0
        %370 = vmatprep.subr.mxu0 0.0
        %371 = vmatpush1.xpose.msra.mxu0 0.0
        %372 = vmatprep.subr.mxu0 0.0
        %373 = vmatpush1.xpose.msra.mxu0 0.0
        %374 = vmatprep.subr.mxu0 0.0
        %375 = vmatpush1.xpose.msra.mxu0 0.0
        %376 = vmatprep.subr.mxu0 0.0
        %377 = vmatpush1.xpose.msra.mxu0 0.0
        %378 = vmatprep.subr.mxu0 0.0
        %379 = vmatpush1.xpose.msra.mxu0 0.0
        %380 = vmatprep.subr.mxu0 0.0
        %381 = vmatpush1.xpose.msra.mxu0 0.0
        %382 = vmatprep.subr.mxu0 0.0
        %383 = vmatpush1.xpose.msra.mxu0 0.0
        %384 = vmatprep.subr.mxu0 0.0
        %385 = vmatpush1.xpose.msra.mxu0 0.0
        %386 = vmatprep.subr.mxu0 0.0
        %387 = vmatpush1.xpose.msra.mxu0 0.0
        %388 = vmatprep.subr.mxu0 0.0
        %389 = vmatpush1.xpose.msra.mxu0 0.0
        %390 = vmatprep.subr.mxu0 0.0
        %391 = vmatpush1.xpose.msra.mxu0 0.0
        %392 = vmatprep.subr.mxu0 0.0
        %393 = vmatpush1.xpose.msra.mxu0 0.0
        %394 = vmatprep.subr.mxu0 0.0
        %395 = vmatpush1.xpose.msra.mxu0 0.0
        %396 = vmatprep.subr.mxu0 0.0
        %397 = vmatpush1.xpose.msra.mxu0 0.0
        %398 = vmatprep.subr.mxu0 0.0
        %399 = vmatpush1.xpose.msra.mxu0 0.0
        %400 = vmatprep.subr.mxu0 0.0
        %401 = vmatpush1.xpose.msra.mxu0 0.0
        %402 = vmatprep.subr.mxu0 0.0
        %403 = vmatpush1.xpose.msra.mxu0 0.0
        %404 = vmatprep.subr.mxu0 0.0
        %405 = vmatpush1.xpose.msra.mxu0 0.0
        %406 = vmatprep.subr.mxu0 0.0
        %407 = vmatpush1.xpose.msra.mxu0 0.0
        %408 = vmatprep.subr.mxu0 0.0
        %409 = vmatpush1.xpose.msra.mxu0 0.0
        %410 = vmatprep.subr.mxu0 0.0
        %411 = vmatpush1.xpose.msra.mxu0 0.0
        %412 = vmatprep.mubr.f32.mxu0 0.0
        %413 = vmatmul.mubr.f32.gmra.mrb[0].mxu0 %v343
        %v414 = vpop.f32.mrb[0].mxu0
        %v415 = vadd.f32 0.0, %v414
        %v416 = vpop.f32.mrb[0].mxu0
        %417 = vdwg.mxu0
        %vm418 = vcmask 64512
        %v419 = vsel %vm418, %v415, -inf
        %420 = vmax.xlane.f32.xlu0 %v419
        %v421 = vpop.xlane.xlu0 %420
        %v422 = vsub.f32 %v415, %v421
        %v423 = vmul.f32 %v422, 1.442695
        %v424 = vpow.pop %v423
        %v425 = vsel %vm418, %v424, 0.0
        %426 = vadd.xlane.f32.xlu0 %v425
        %v427 = vpop.xlane.xlu0 %426
        %v428 = vrcp.pop %v427
        %v429 = vmul.f32 1.0, %v428
        %v430 = vmul.f32 %v424, %v429
        %v432 = vsel %vm418, %v430, 0
        %434 = vmatprep.subr.mxu0 0.0
        %435 = vmatpush1.msra.mxu0 %v339
        %436 = vmatprep.subr.mxu0 0.0
        %437 = vmatpush1.msra.mxu0 0.0
        %438 = vmatprep.subr.mxu0 0.0
        %439 = vmatpush1.msra.mxu0 0.0
        %440 = vmatprep.subr.mxu0 0.0
        %441 = vmatpush1.msra.mxu0 0.0
        %442 = vmatprep.subr.mxu0 0.0
        %443 = vmatpush1.msra.mxu0 0.0
        %444 = vmatprep.subr.mxu0 0.0
        %445 = vmatpush1.msra.mxu0 0.0
        %446 = vmatprep.subr.mxu0 0.0
        %447 = vmatpush1.msra.mxu0 0.0
        %448 = vmatprep.subr.mxu0 0.0
        %449 = vmatpush1.msra.mxu0 0.0
        %450 = vmatprep.subr.mxu0 0.0
        %451 = vmatpush1.msra.mxu0 0.0
        %452 = vmatprep.subr.mxu0 0.0
        %453 = vmatpush1.msra.mxu0 0.0
        %454 = vmatprep.subr.mxu0 0.0
        %455 = vmatpush1.msra.mxu0 0.0
        %456 = vmatprep.subr.mxu0 0.0
        %457 = vmatpush1.msra.mxu0 0.0
        %458 = vmatprep.subr.mxu0 0.0
        %459 = vmatpush1.msra.mxu0 0.0
        %460 = vmatprep.subr.mxu0 0.0
        %461 = vmatpush1.msra.mxu0 0.0
        %462 = vmatprep.subr.mxu0 0.0
        %463 = vmatpush1.msra.mxu0 0.0
        %464 = vmatprep.subr.mxu0 0.0
        %465 = vmatpush1.msra.mxu0 0.0
        %466 = vmatprep.subr.mxu0 0.0
        %467 = vmatpush1.msra.mxu0 0.0
        %468 = vmatprep.subr.mxu0 0.0
        %469 = vmatpush1.msra.mxu0 0.0
        %470 = vmatprep.subr.mxu0 0.0
        %471 = vmatpush1.msra.mxu0 0.0
        %472 = vmatprep.subr.mxu0 0.0
        %473 = vmatpush1.msra.mxu0 0.0
        %474 = vmatprep.subr.mxu0 0.0
        %475 = vmatpush1.msra.mxu0 0.0
        %476 = vmatprep.subr.mxu0 0.0
        %477 = vmatpush1.msra.mxu0 0.0
        %478 = vmatprep.subr.mxu0 0.0
        %479 = vmatpush1.msra.mxu0 0.0
        %480 = vmatprep.subr.mxu0 0.0
        %481 = vmatpush1.msra.mxu0 0.0
        %482 = vmatprep.subr.mxu0 0.0
        %483 = vmatpush1.msra.mxu0 0.0
        %484 = vmatprep.subr.mxu0 0.0
        %485 = vmatpush1.msra.mxu0 0.0
        %486 = vmatprep.subr.mxu0 0.0
        %487 = vmatpush1.msra.mxu0 0.0
        %488 = vmatprep.subr.mxu0 0.0
        %489 = vmatpush1.msra.mxu0 0.0
        %490 = vmatprep.subr.mxu0 0.0
        %491 = vmatpush1.msra.mxu0 0.0
        %492 = vmatprep.subr.mxu0 0.0
        %493 = vmatpush1.msra.mxu0 0.0
        %494 = vmatprep.subr.mxu0 0.0
        %495 = vmatpush1.msra.mxu0 0.0
        %496 = vmatprep.subr.mxu0 0.0
        %497 = vmatpush1.msra.mxu0 0.0
        %498 = vmatprep.mubr.f32.mxu0 0.0
        %499 = vmatmul.mubr.f32.gmra.mrb[0].mxu0 %v432
        %v500 = vpop.f32.mrb[0].mxu0
        %v501 = vadd.f32 0.0, %v500
        %v502 = vpop.f32.mrb[0].mxu0
        %503 = vdwg.mxu0
        %504 = vst.msk [vmem:[%s329] sm:$0xff] %vm341, %v501
        %505 = vst.msk [vmem:[%s336] sm:$0xff] %vm418, %v430
        %s506 = sand.u32 %s145, 1
        %s507 = scalar_lea.sflag [#allocation4], %s506
        %s508 = sand.u32 %s145, 1
        %s509 = smul.addr %s508, 8
        %s510 = scalar_lea.vmem [#allocation8], %s509
        %s511 = sand.u32 %s175, 1
        %s512 = scalar_lea.sflag [#allocation10], %s511
        %s513 = sand.u32 %s175, 1
        %s514 = smul.addr %s513, 8
        %s515 = scalar_lea.vmem [#allocation9], %s514
        // Predicated region
        $region45: #{tpu_custom_call.1} parent=31 // pred_check
          %p516 = pneg %p155
        $region46: #{tpu_custom_call.1} parent=31 // pred_check_branch
          %518 = sbr.rel (%p516) target = $region48
        $region47: #{tpu_custom_call.1} parent=31 // pred_region
          %s520 = ssub.s32 128, 128
          %521 = vsyncadd %s507, %s520
          %s522 = sadd.s32 %s35, %s34
          %s523 = smul.addr %s33, 4
          %s524 = sadd.s32 %s522, %s523
          %s525 = smul.addr %s524, 128
          %s526 = scalar_lea.hbm %s3, %s525
          %s528 = sshll.u32 %s510, 4
          %s529 = int_to_ptr.vmem [resolvable:$true] %s528
          %531 = dma.vmem_to_hbm [thread:$0]  %s529, 128, %s526, %s507
        $region48: #{tpu_custom_call.1} parent=31 // pred_fallthru
          _
        // Predicated region
        $region49: #{tpu_custom_call.1} parent=31 // pred_check
          %p532 = pneg %p185
        $region50: #{tpu_custom_call.1} parent=31 // pred_check_branch
          %534 = sbr.rel (%p532) target = $region52
        $region51: #{tpu_custom_call.1} parent=31 // pred_region
          %s536 = ssub.s32 128, 128
          %537 = vsyncadd %s512, %s536
          %s538 = sadd.s32 %s35, %s34
          %s539 = smul.addr %s33, 4
          %s540 = sadd.s32 %s538, %s539
          %s541 = smul.addr %s540, 128
          %s542 = scalar_lea.hbm %s4, %s541
          %s544 = sshll.u32 %s515, 4
          %s545 = int_to_ptr.vmem [resolvable:$true] %s544
          %547 = dma.vmem_to_hbm [thread:$0]  %s545, 128, %s542, %s512
        $region52: #{tpu_custom_call.1} parent=31 // pred_fallthru
          _
      $region32: #{tpu_custom_call.1} parent=5 // pred_fallthru
        _
      %p548 = scmp.le.s32.totalorder 2, %s23
      // Predicated region
      $region53: #{tpu_custom_call.1} parent=5 // pred_check
        %p549 = pneg %p548
      $region54: #{tpu_custom_call.1} parent=5 // pred_check_branch
        %551 = sbr.rel (%p549) target = $region56
      $region55: #{tpu_custom_call.1} parent=5 // pred_region
        %s552 = ssub.s32 %s23, 2
        // Predicated region
        $region57: #{tpu_custom_call.1} parent=55 // pred_check
          %p553 = pneg %p161
        $region58: #{tpu_custom_call.1} parent=55 // pred_check_branch
          %555 = sbr.rel (%p553) target = $region60
        $region59: #{tpu_custom_call.1} parent=55 // pred_region
          %s556 = sand.u32 %s146, 1
          %s557 = scalar_lea.sflag [#allocation4], %s556
          %s558 = sand.u32 %s146, 1
          %s559 = smul.addr %s558, 8
          %s560 = scalar_lea.vmem [#allocation8], %s559
          %561 = dma.done %s557, 128
        $region60: #{tpu_custom_call.1} parent=55 // pred_fallthru
          _
        // Predicated region
        $region61: #{tpu_custom_call.1} parent=55 // pred_check
          %p562 = pneg %p191
        $region62: #{tpu_custom_call.1} parent=55 // pred_check_branch
          %564 = sbr.rel (%p562) target = $region64
        $region63: #{tpu_custom_call.1} parent=55 // pred_region
          %s565 = sand.u32 %s176, 1
          %s566 = scalar_lea.sflag [#allocation10], %s565
          %s567 = sand.u32 %s176, 1
          %s568 = smul.addr %s567, 8
          %s569 = scalar_lea.vmem [#allocation9], %s568
          %570 = dma.done %s566, 128
        $region64: #{tpu_custom_call.1} parent=55 // pred_fallthru
          _
      $region56: #{tpu_custom_call.1} parent=5 // pred_fallthru
        _
    $region6: #{tpu_custom_call.1} parent=1 // loop_footer
      %s27 = sadd.s32 1, %s23
    $region7: #{tpu_custom_call.1} parent=1 // loop_footer_branch
      %22 = sbr.rel target = $region3
    $region8: #{tpu_custom_call.1} parent=1 // loop_exit
      _
    %571 = vsyncpa [#allocation3], 1
    %s572 = scalar_lea.sflag [#allocation3], 1
    %573 = vsyncpa %s572, 1
    %574 = vsyncpa [#allocation6], 1
    %s575 = scalar_lea.sflag [#allocation6], 1
    %576 = vsyncpa %s575, 1
    %577 = vsyncpa [#allocation4], 1
    %s578 = scalar_lea.sflag [#allocation4], 1
    %579 = vsyncpa %s578, 1
    %580 = vsyncpa [#allocation10], 1
    %s581 = scalar_lea.sflag [#allocation10], 1
    %582 = vsyncpa %s581, 1

</llo_original>
